<compile_context>
chip_gen: v7x
topology: tpu7x:2x2x1
jax: 0.10.0
libtpu: 0.0.40
codegen_flags: <defaults>
</compile_context>

<pallas_src>
import functools

import jax
import jax.numpy as jnp
from jax.experimental import pallas as pl
from jax.experimental.pallas import tpu as pltpu

LANES = 128
SUBLANES = 8
NUM_CORES = 2                         # v7x has 2 TensorCores; harmless elsewhere
TARGET_TILE_BYTES = 2 * 1024 * 1024   # per-input VMEM buffer (double-buffered)
VMEM_LIMIT_BYTES = 48 * 1024 * 1024


def _round_down(x, m):
    return (x // m) * m


def _partial_sums(pred, gt, mask, compute_dtype):
    """Elementwise |pred-gt|*mask and mask sums with f32 accumulation (jnp)."""
    p = pred.astype(compute_dtype)
    g = gt.astype(compute_dtype)
    m = mask.astype(compute_dtype)
    num = (jnp.abs(p - g) * m).astype(jnp.float32).sum()
    den = m.astype(jnp.float32).sum()
    return num, den


def _make_kernel(steps, full_blocks, compute_dtype, needs_clamp):
    def kernel(p_ref, g_ref, m_ref, num_ref, den_ref):
        j = pl.program_id(1)  # sequential reduction axis

        @pl.when(j == 0)
        def _init():
            num_ref[...] = jnp.zeros_like(num_ref)
            den_ref[...] = jnp.zeros_like(den_ref)

        def _accumulate():
            p = p_ref[...].astype(compute_dtype)
            g = g_ref[...].astype(compute_dtype)
            m = m_ref[...].astype(compute_dtype)
            # Elementwise math stays in the (possibly 16-bit) compute dtype on
            # the VPU; widen to f32 only for the partial accumulation.
            contrib = (jnp.abs(p - g) * m).astype(jnp.float32)
            m32 = m.astype(jnp.float32)
            num_ref[...] += contrib.reshape(-1, SUBLANES, LANES).sum(axis=0)
            den_ref[...] += m32.reshape(-1, SUBLANES, LANES).sum(axis=0)

        if needs_clamp:
            # The last core may have one padded step past the real blocks (its
            # index_map is clamped to an in-bounds block); skip it entirely so
            # nothing is double counted.
            b = pl.program_id(0) * steps + j
            pl.when(b < full_blocks)(_accumulate)
        else:
            _accumulate()

    return kernel


@functools.partial(jax.jit, static_argnames=("eps", "tile_rows_cap"))
def mask_l1_loss(pred, gt, mask, eps=1e-6, tile_rows_cap=None):
    """Pallas implementation of MaskL1Loss.forward. Returns an f32 scalar."""
    assert pred.shape == gt.shape == mask.shape
    total = pred.size

    itemsizes = [jnp.dtype(x.dtype).itemsize for x in (pred, gt, mask)]
    min_item, max_item = min(itemsizes), max(itemsizes)
    # Native sublane multiple of the most tightly packed input dtype.
    sub_mult = SUBLANES * max(1, 4 // min_item)

    same_dtype = pred.dtype == gt.dtype == mask.dtype
    if same_dtype and pred.dtype in (jnp.dtype(jnp.float32), jnp.dtype(jnp.bfloat16)):
        compute_dtype = pred.dtype
    else:
        compute_dtype = jnp.float32

    # --- Flatten to a lane-dense (rows, 128) view (free bitcast when total is
    # a multiple of 128).
    pad = (-total) % LANES
    padded_total = total + pad

    def flatten(x):
        x = jnp.ravel(x)
        if pad:
            # TODO(synk): this full-array copy only triggers for element counts
            # that aren't a multiple of 128; removing it needs a 1-D-block or
            # manual-DMA kernel path.
            x = jnp.pad(x, (0, pad))  # zero pad -> contributes 0 to num & den
        return x.reshape(padded_total // LANES, LANES)

    p2, g2, m2 = flatten(pred), flatten(gt), flatten(mask)
    rows = padded_total // LANES

    # --- Dtype-aware tile size (<= ~TARGET_TILE_BYTES per input buffer).
    target_rows = max(
        sub_mult, _round_down(TARGET_TILE_BYTES // (LANES * max_item), sub_mult))
    if tile_rows_cap is not None:
        target_rows = min(target_rows,
                          max(sub_mult, _round_down(tile_rows_cap, sub_mult)))
    tile_rows = min(target_rows, _round_down(rows, sub_mult))

    if tile_rows == 0:
        # Input smaller than one minimal tile: plain jnp fallback.
        num, den = _partial_sums(p2, g2, m2, compute_dtype)
        return num / (den + jnp.float32(eps))

    full_blocks = rows // tile_rows
    num_cores = min(NUM_CORES, full_blocks)
    steps = pl.cdiv(full_blocks, num_cores)
    needs_clamp = num_cores * steps != full_blocks

    if needs_clamp:
        def data_map(c, j):
            return (jnp.minimum(c * steps + j, full_blocks - 1), 0)
    else:
        def data_map(c, j):
            return (c * steps + j, 0)

    data_specs = [pl.BlockSpec((tile_rows, LANES), data_map) for _ in range(3)]
    part_spec = pl.BlockSpec((SUBLANES, LANES), lambda c, j: (c, 0))
    part_shape = jax.ShapeDtypeStruct((num_cores * SUBLANES, LANES), jnp.float32)

    kernel_elems = full_blocks * tile_rows * LANES
    cost = pl.CostEstimate(
        flops=5 * kernel_elems,
        transcendentals=0,
        bytes_accessed=kernel_elems * sum(itemsizes)
        + 2 * num_cores * SUBLANES * LANES * 4,
    )

    num_parts, den_parts = pl.pallas_call(
        _make_kernel(steps, full_blocks, compute_dtype, needs_clamp),
        out_shape=[part_shape, part_shape],
        grid_spec=pltpu.PrefetchScalarGridSpec(
            num_scalar_prefetch=0,
            grid=(num_cores, steps),
            in_specs=data_specs,
            out_specs=[part_spec, part_spec],
        ),
        compiler_params=pltpu.CompilerParams(
            dimension_semantics=("parallel", "arbitrary"),
            vmem_limit_bytes=VMEM_LIMIT_BYTES,
        ),
        cost_estimate=cost,
    )(p2, g2, m2)

    num = jnp.sum(num_parts)
    den = jnp.sum(den_parts)

    # Leftover rows (< one tile) not covered by whole blocks: tiny fused jnp op
    # that only reads the tail slice.
    tail_start = full_blocks * tile_rows
    if tail_start < rows:
        tn, td = _partial_sums(p2[tail_start:], g2[tail_start:], m2[tail_start:],
                               compute_dtype)
        num = num + tn
        den = den + td

    return num / (den + jnp.float32(eps))


def mask_l1_loss_ref(pred, gt, mask, eps=1e-6):
    pred = pred.astype(jnp.float32)
    gt = gt.astype(jnp.float32)
    mask = mask.astype(jnp.float32)
    return (jnp.abs(pred - gt) * mask).sum() / (mask.sum() + eps)


if __name__ == "__main__":
    key = jax.random.PRNGKey(0)
    k1, k2, k3, k4, k5, k6, k7, k8, k9 = jax.random.split(key, 9)

    # Case 1: NCHW f32 (batch=2, channels=4, spatial=16) -- zero-copy fast path.
    N, C, H, W = 2, 4, 16, 16
    pred = jax.random.uniform(k1, (N, C, H, W), dtype=jnp.float32)
    gt = jax.random.uniform(k2, (N, C, H, W), dtype=jnp.float32)
    mask = (jax.random.uniform(k3, (N, C, H, W)) > 0.5).astype(jnp.float32)

    loss = mask_l1_loss(pred, gt, mask)
    jax.block_until_ready(loss)
    ref = mask_l1_loss_ref(pred, gt, mask)
    assert jnp.allclose(loss, ref, rtol=1e-5, atol=1e-6), (loss, ref)

    # Case 2: ragged size + bf16 inputs + non-default eps (small pad, jnp-tail
    # path, bf16-native elementwise in the kernel).
    shape2 = (2, 3, 33, 47)
    pred2 = jax.random.uniform(k4, shape2, dtype=jnp.float32).astype(jnp.bfloat16)
    gt2 = jax.random.uniform(k5, shape2, dtype=jnp.float32).astype(jnp.bfloat16)
    mask2 = (jax.random.uniform(k6, shape2) > 0.5).astype(jnp.bfloat16)

    loss2 = mask_l1_loss(pred2, gt2, mask2, eps=1e-3)
    jax.block_until_ready(loss2)
    ref2 = mask_l1_loss_ref(pred2, gt2, mask2, eps=1e-3)
    assert jnp.allclose(loss2, ref2, rtol=1e-2, atol=1e-3), (loss2, ref2)

    # Case 3: force a small tile so the multi-core grid, clamped extra step,
    # and jnp-tail paths are all exercised at a small shape.
    shape3 = (2, 4, 43, 16)   # rows = 43 -> 5 full blocks of 8 rows + 3 tail rows
    pred3 = jax.random.uniform(k7, shape3, dtype=jnp.float32)
    gt3 = jax.random.uniform(k8, shape3, dtype=jnp.float32)
    mask3 = (jax.random.uniform(k9, shape3) > 0.5).astype(jnp.float32)

    loss3 = mask_l1_loss(pred3, gt3, mask3, tile_rows_cap=8)
    jax.block_until_ready(loss3)
    ref3 = mask_l1_loss_ref(pred3, gt3, mask3)
    assert jnp.allclose(loss3, ref3, rtol=1e-5, atol=1e-6), (loss3, ref3)

    print("KERNEL_OK")
</pallas_src>

<mosaic_0001>
module attributes {stable_mosaic.version = 11 : i64} {
  func.func @kernel(%arg0: i32, %arg1: i32, %arg2: memref<16x128xf32, #tpu.memory_space<vmem>>, %arg3: memref<16x128xf32, #tpu.memory_space<vmem>>, %arg4: memref<16x128xf32, #tpu.memory_space<vmem>>, %arg5: memref<8x128xf32, #tpu.memory_space<vmem>>, %arg6: memref<8x128xf32, #tpu.memory_space<vmem>>) attributes {dimension_semantics = [#tpu.dimension_semantics<parallel>, #tpu.dimension_semantics<arbitrary>], iteration_bounds = array<i64: 1, 1>, scalar_prefetch = 0 : i64, scratch_operands = 0 : i64, tpu.core_type = #tpu.core_type<tc>, window_params = [{transform_indices = @transform_0, window_bounds = array<i64: 16, 128>}, {transform_indices = @transform_1, window_bounds = array<i64: 16, 128>}, {transform_indices = @transform_2, window_bounds = array<i64: 16, 128>}, {transform_indices = @transform_3, window_bounds = array<i64: 8, 128>}, {transform_indices = @transform_4, window_bounds = array<i64: 8, 128>}]} {
    %c0_i32 = arith.constant 0 : i32
    %0 = arith.cmpi eq, %arg1, %c0_i32 : i32
    %1 = arith.extui %0 : i1 to i32
    %c0_i32_0 = arith.constant 0 : i32
    %2 = arith.cmpi ne, %1, %c0_i32_0 : i32
    scf.if %2 {
      %cst_15 = arith.constant 0.000000e+00 : f32
      %19 = vector.broadcast %cst_15 : f32 to vector<8x128xf32>
      %c0_16 = arith.constant 0 : index
      %c0_17 = arith.constant 0 : index
      %20 = vector.load %arg5[%c0_16, %c0_17] : memref<8x128xf32, #tpu.memory_space<vmem>>, vector<8x128xf32>
      tpu.vector_store %arg5[%c0_16, %c0_17], %19 {strides = array<i32>} : memref<8x128xf32, #tpu.memory_space<vmem>>, vector<8x128xf32>,
      %cst_18 = arith.constant 0.000000e+00 : f32
      %21 = vector.broadcast %cst_18 : f32 to vector<8x128xf32>
      %c0_19 = arith.constant 0 : index
      %c0_20 = arith.constant 0 : index
      %22 = vector.load %arg6[%c0_19, %c0_20] : memref<8x128xf32, #tpu.memory_space<vmem>>, vector<8x128xf32>
      tpu.vector_store %arg6[%c0_19, %c0_20], %21 {strides = array<i32>} : memref<8x128xf32, #tpu.memory_space<vmem>>, vector<8x128xf32>,
    } else {
    }
    %c0 = arith.constant 0 : index
    %c0_1 = arith.constant 0 : index
    %3 = vector.load %arg2[%c0, %c0_1] : memref<16x128xf32, #tpu.memory_space<vmem>>, vector<16x128xf32>
    %c0_2 = arith.constant 0 : index
    %c0_3 = arith.constant 0 : index
    %4 = vector.load %arg3[%c0_2, %c0_3] : memref<16x128xf32, #tpu.memory_space<vmem>>, vector<16x128xf32>
    %c0_4 = arith.constant 0 : index
    %c0_5 = arith.constant 0 : index
    %5 = vector.load %arg4[%c0_4, %c0_5] : memref<16x128xf32, #tpu.memory_space<vmem>>, vector<16x128xf32>
    %6 = arith.subf %3, %4 : vector<16x128xf32>
    %7 = math.absf %6 : vector<16x128xf32>
    %8 = arith.mulf %7, %5 : vector<16x128xf32>
    %c0_6 = arith.constant 0 : index
    %c0_7 = arith.constant 0 : index
    %9 = vector.load %arg5[%c0_6, %c0_7] : memref<8x128xf32, #tpu.memory_space<vmem>>, vector<8x128xf32>
    %10 = vector.shape_cast %8 : vector<16x128xf32> to vector<2x8x128xf32>
    %cst = arith.constant dense<0.000000e+00> : vector<8x128xf32>
    %11 = vector.multi_reduction <add>, %10, %cst [0] : vector<2x8x128xf32> to vector<8x128xf32>
    %12 = arith.addf %9, %11 : vector<8x128xf32>
    %c0_8 = arith.constant 0 : index
    %c0_9 = arith.constant 0 : index
    %13 = vector.load %arg5[%c0_8, %c0_9] : memref<8x128xf32, #tpu.memory_space<vmem>>, vector<8x128xf32>
    tpu.vector_store %arg5[%c0_8, %c0_9], %12 {strides = array<i32>} : memref<8x128xf32, #tpu.memory_space<vmem>>, vector<8x128xf32>,
    %c0_10 = arith.constant 0 : index
    %c0_11 = arith.constant 0 : index
    %14 = vector.load %arg6[%c0_10, %c0_11] : memref<8x128xf32, #tpu.memory_space<vmem>>, vector<8x128xf32>
    %15 = vector.shape_cast %5 : vector<16x128xf32> to vector<2x8x128xf32>
    %cst_12 = arith.constant dense<0.000000e+00> : vector<8x128xf32>
    %16 = vector.multi_reduction <add>, %15, %cst_12 [0] : vector<2x8x128xf32> to vector<8x128xf32>
    %17 = arith.addf %14, %16 : vector<8x128xf32>
    %c0_13 = arith.constant 0 : index
    %c0_14 = arith.constant 0 : index
    %18 = vector.load %arg6[%c0_13, %c0_14] : memref<8x128xf32, #tpu.memory_space<vmem>>, vector<8x128xf32>
    tpu.vector_store %arg6[%c0_13, %c0_14], %17 {strides = array<i32>} : memref<8x128xf32, #tpu.memory_space<vmem>>, vector<8x128xf32>,
    return
  }
  func.func @transform_0(%arg0: i32, %arg1: i32) -> (i32, i32) {
    %c1_i32 = arith.constant 1 : i32
    %0 = arith.muli %arg0, %c1_i32 : i32
    %1 = arith.addi %0, %arg1 : i32
    %c0_i32 = arith.constant 0 : i32
    %c0_i32_0 = arith.constant 0 : i32
    return %1, %c0_i32 : i32, i32
  }
  func.func @transform_1(%arg0: i32, %arg1: i32) -> (i32, i32) {
    %c1_i32 = arith.constant 1 : i32
    %0 = arith.muli %arg0, %c1_i32 : i32
    %1 = arith.addi %0, %arg1 : i32
    %c0_i32 = arith.constant 0 : i32
    %c0_i32_0 = arith.constant 0 : i32
    return %1, %c0_i32 : i32, i32
  }
  func.func @transform_2(%arg0: i32, %arg1: i32) -> (i32, i32) {
    %c1_i32 = arith.constant 1 : i32
    %0 = arith.muli %arg0, %c1_i32 : i32
    %1 = arith.addi %0, %arg1 : i32
    %c0_i32 = arith.constant 0 : i32
    %c0_i32_0 = arith.constant 0 : i32
    return %1, %c0_i32 : i32, i32
  }
  func.func @transform_3(%arg0: i32, %arg1: i32) -> (i32, i32) {
    %c0_i32 = arith.constant 0 : i32
    %c0_i32_0 = arith.constant 0 : i32
    return %arg0, %c0_i32 : i32, i32
  }
  func.func @transform_4(%arg0: i32, %arg1: i32) -> (i32, i32) {
    %c0_i32 = arith.constant 0 : i32
    %c0_i32_0 = arith.constant 0 : i32
    return %arg0, %c0_i32 : i32, i32
  }
}

</mosaic_0001>

<llo_original>
// kernel: mask_l1_loss.1
$region0: #{mask_l1_loss.1}
  #allocation0 [shape = 'u32[]', space=smem, size = 0x4, offset = 0x4, fixed_abs, tag = 'smem constant byte address 0x4 - core index']
  #allocation1 [shape = 'u32[144,128]{1,0:T(1,128)}', space=vmem, size = 0x12000, scoped, tag = 'internal scratch']
  %s0 = inlined_call_operand.vmem [shape: f32[16,128], index: 0, kind: input, shape index: {}]
  %s1 = inlined_call_operand.vmem [shape: f32[16,128], index: 1, kind: input, shape index: {}]
  %s2 = inlined_call_operand.vmem [shape: f32[16,128], index: 2, kind: input, shape index: {}]
  %s3 = inlined_call_operand.vmem [shape: f32[8,128], index: 3, kind: output, shape index: {0}]
  %s4 = inlined_call_operand.vmem [shape: f32[8,128], index: 4, kind: output, shape index: {1}]
  %5 = xla_tuple %s3, %s4
  %s6 = sld [smem:[#allocation0]]
  $region34: #{mask_l1_loss.1} parent=0
    _
  %s8 = ssub.s32 1, %s6
  %s9 = scalar_select 0, %s8, %s6
  // Predicated region
  $region2: #{mask_l1_loss.1} parent=0 // pred_check
    _
  $region3: #{mask_l1_loss.1} parent=0 // pred_check_branch
    %11 = sbr.rel (0) target = $region5
  $region4: #{mask_l1_loss.1} parent=0 // pred_region
    %s12 = sadd.s32 0, 0
    %s13 = smul.u32 2, %s12
    %p14 = scmp.lt.s32.totalorder %s13, 1
    %s15 = scalar_select %p14, %s13, 1
    %s16 = smul.addr %s15, 8
    %s17 = scalar_lea.vmem %s0, %s16
    %s18 = sadd.s32 0, 0
    %s19 = smul.u32 2, %s18
  $region5: #{mask_l1_loss.1} parent=0 // pred_fallthru
    _
  // Predicated region
  $region6: #{mask_l1_loss.1} parent=0 // pred_check
    _
  $region7: #{mask_l1_loss.1} parent=0 // pred_check_branch
    %21 = sbr.rel (0) target = $region9
  $region8: #{mask_l1_loss.1} parent=0 // pred_region
    %s22 = sadd.s32 0, 0
    %s23 = smul.u32 2, %s22
    %p24 = scmp.lt.s32.totalorder %s23, 1
    %s25 = scalar_select %p24, %s23, 1
    %s26 = smul.addr %s25, 8
    %s27 = scalar_lea.vmem %s1, %s26
    %s28 = sadd.s32 0, 0
    %s29 = smul.u32 2, %s28
  $region9: #{mask_l1_loss.1} parent=0 // pred_fallthru
    _
  // Predicated region
  $region10: #{mask_l1_loss.1} parent=0 // pred_check
    _
  $region11: #{mask_l1_loss.1} parent=0 // pred_check_branch
    %31 = sbr.rel (0) target = $region13
  $region12: #{mask_l1_loss.1} parent=0 // pred_region
    %s32 = sadd.s32 0, 0
    %s33 = smul.u32 2, %s32
    %p34 = scmp.lt.s32.totalorder %s33, 1
    %s35 = scalar_select %p34, %s33, 1
    %s36 = smul.addr %s35, 8
    %s37 = scalar_lea.vmem %s2, %s36
    %s38 = sadd.s32 0, 0
    %s39 = smul.u32 2, %s38
  $region13: #{mask_l1_loss.1} parent=0 // pred_fallthru
    _
  %s40 = sadd.s32 0, 0
  %s41 = smul.u32 2, %s40
  %p42 = scmp.lt.s32.totalorder %s41, 1
  %s43 = scalar_select %p42, %s41, 1
  %s44 = smul.addr %s43, 8
  %s45 = scalar_lea.vmem %s0, %s44
  %s46 = sadd.s32 0, 0
  %s47 = smul.u32 2, %s46
  %p48 = scmp.lt.s32.totalorder %s47, 1
  %s49 = scalar_select %p48, %s47, 1
  %s50 = smul.addr %s49, 8
  %s51 = scalar_lea.vmem %s1, %s50
  %s52 = sadd.s32 0, 0
  %s53 = smul.u32 2, %s52
  %p54 = scmp.lt.s32.totalorder %s53, 1
  %s55 = scalar_select %p54, %s53, 1
  %s56 = smul.addr %s55, 8
  %s57 = scalar_lea.vmem %s2, %s56
  %s58 = sadd.s32 0, 0
  %s59 = smul.u32 2, %s58
  %p60 = scmp.lt.s32.totalorder %s59, 1
  %s61 = scalar_select %p60, %s59, 1
  %s62 = smul.addr %s61, 8
  %s63 = scalar_lea.vmem %s0, %s62
  %s64 = sadd.s32 0, 0
  %s65 = smul.u32 2, %s64
  %s66 = sadd.s32 0, 0
  %s67 = smul.u32 2, %s66
  %p68 = scmp.lt.s32.totalorder %s67, 1
  %s69 = scalar_select %p68, %s67, 1
  %s70 = smul.addr %s69, 8
  %s71 = scalar_lea.vmem %s1, %s70
  %s72 = sadd.s32 0, 0
  %s73 = smul.u32 2, %s72
  %s74 = sadd.s32 0, 0
  %s75 = smul.u32 2, %s74
  %p76 = scmp.lt.s32.totalorder %s75, 1
  %s77 = scalar_select %p76, %s75, 1
  %s78 = smul.addr %s77, 8
  %s79 = scalar_lea.vmem %s2, %s78
  %s80 = sadd.s32 0, 0
  %s81 = smul.u32 2, %s80
  %p82 = scmp.eq.s32.totalorder 0, 0
  // Predicated region
  $region14: #{mask_l1_loss.1} parent=0 // pred_check
    %p83 = pneg %p82
  $region15: #{mask_l1_loss.1} parent=0 // pred_check_branch
    %85 = sbr.rel (%p83) target = $region17
  $region16: #{mask_l1_loss.1} parent=0 // pred_region
    %86 = vst [vmem:[%s3] sm:$0xff] 0.0
    %87 = vst [vmem:[%s4] sm:$0xff] 0.0
  $region17: #{mask_l1_loss.1} parent=0 // pred_fallthru
    _
  %v88 = vld [vmem:[%s63] sm:$0xff]
  %v89 = vld [vmem:[%s63 + $0x8] sm:$0xff]
  %v90 = vld [vmem:[%s71] sm:$0xff]
  %v91 = vld [vmem:[%s71 + $0x8] sm:$0xff]
  %v92 = vld [vmem:[%s79] sm:$0xff]
  %v93 = vld [vmem:[%s79 + $0x8] sm:$0xff]
  %v94 = vsub.f32 %v88, %v90
  %v95 = vsub.f32 %v89, %v91
  %v96 = vand.u32 2147483647, %v94
  %v97 = vand.u32 2147483647, %v95
  %v98 = vmul.f32 %v96, %v92
  %v99 = vmul.f32 %v97, %v93
  %v100 = vld [vmem:[%s3] sm:$0xff]
  %v101 = vadd.f32 %v98, %v99
  %v102 = vadd.f32 %v100, %v101
  %103 = vst [vmem:[%s3] sm:$0xff] %v102
  %v104 = vld [vmem:[%s4] sm:$0xff]
  %v105 = vadd.f32 %v92, %v93
  %v106 = vadd.f32 %v104, %v105
  %107 = vst [vmem:[%s4] sm:$0xff] %v106
  // Predicated region
  $region18: #{mask_l1_loss.1} parent=0 // pred_check
    _
  $region19: #{mask_l1_loss.1} parent=0 // pred_check_branch
    %109 = sbr.rel (0) target = $region21
  $region20: #{mask_l1_loss.1} parent=0 // pred_region
    _
  $region21: #{mask_l1_loss.1} parent=0 // pred_fallthru
    _
  // Predicated region
  $region22: #{mask_l1_loss.1} parent=0 // pred_check
    _
  $region23: #{mask_l1_loss.1} parent=0 // pred_check_branch
    %111 = sbr.rel (0) target = $region25
  $region24: #{mask_l1_loss.1} parent=0 // pred_region
    _
  $region25: #{mask_l1_loss.1} parent=0 // pred_fallthru
    _
  // Predicated region
  $region26: #{mask_l1_loss.1} parent=0 // pred_check
    _
  $region27: #{mask_l1_loss.1} parent=0 // pred_check_branch
    %113 = sbr.rel (0) target = $region29
  $region28: #{mask_l1_loss.1} parent=0 // pred_region
    _
  $region29: #{mask_l1_loss.1} parent=0 // pred_fallthru
    _
  // Predicated region
  $region30: #{mask_l1_loss.1} parent=0 // pred_check
    _
  $region31: #{mask_l1_loss.1} parent=0 // pred_check_branch
    %115 = sbr.rel (0) target = $region33
  $region32: #{mask_l1_loss.1} parent=0 // pred_region
    _
  $region33: #{mask_l1_loss.1} parent=0 // pred_fallthru
    _

</llo_original>
